<compile_context>
chip_gen: v6e
topology: v6e:2x2x1
jax: 0.10.0
libtpu: 0.0.40
codegen_flags: <defaults>
</compile_context>

<pallas_src>
import jax
import jax.numpy as jnp
from jax import lax
from jax.experimental import pallas as pl
from jax.experimental.pallas import tpu as pltpu


def _round_up(v, m):
    return (v + m - 1) // m * m


def _choose_tb(B, x_p, h_p, vmem_budget):
    """Pick a batch tile that keeps activations inside the VMEM budget."""
    itemsize = 4  # the hidden intermediate lives in f32
    w_bytes = itemsize * (2 * x_p * h_p + x_p + h_p)      # resident weights/biases
    per_row = itemsize * (4 * x_p + h_p)                  # X(x2) + out(x2) + hidden
    tb = max((vmem_budget - w_bytes) // per_row, 8)
    tb = int(min(tb, 512, _round_up(B, 8)))
    if tb >= 128:
        tb = (tb // 128) * 128          # fill MXU rows
    else:
        tb = _round_up(tb, 8)
    # Prefer >= 2 grid steps so ("parallel",) can shard across v7x's 2 TCs.
    if _round_up(B, tb) // tb < 2 and B >= 16:
        tb = _round_up(max(tb // 2, 8), 8)
    return tb


def upscale_kernel(x_ref, w1_ref, b1_ref, w2_ref, b2_ref, o_ref):
    # x_ref: (tb, x_p); w1_ref: (x_p, h_p); b1_ref: (1, h_p)
    # w2_ref: (h_p, x_p); b2_ref: (1, x_p); o_ref: (tb, x_p)
    x = x_ref[...]
    h = jnp.dot(x, w1_ref[...], preferred_element_type=jnp.float32) + b1_ref[...]
    # SiLU in f32; lax.logistic is the EUP-friendly sigmoid lowering.
    h = h * lax.logistic(h)
    # Cast to the weight dtype only right before the second MXU matmul.
    y = jnp.dot(h.astype(w2_ref.dtype), w2_ref[...],
                preferred_element_type=jnp.float32) + b2_ref[...]
    o_ref[...] = y.astype(o_ref.dtype)


def upscale_block(x, w1, b1, w2, b2, *, tb=None, vmem_budget=24 << 20):
    """Fused UpscaleBlock forward: y = silu(x @ w1.T + b1) @ w2.T + b2.

    x  : (B, x_dim)
    w1 : (h_dim, x_dim)   -- torch nn.Linear weight layout (out, in)
    b1 : (h_dim,)
    w2 : (x_dim, h_dim)
    b2 : (x_dim,)
    """
    B, x_dim = x.shape
    h_dim = w1.shape[0]
    dt = x.dtype

    # Lane-dense (128-aligned) feature dims.
    x_p = _round_up(x_dim, 128)
    h_p = _round_up(h_dim, 128)

    if tb is None:
        tb = _choose_tb(B, x_p, h_p, vmem_budget)
    tb = max(8, _round_up(min(int(tb), _round_up(B, 8)), 8))
    Bp = _round_up(B, tb)
    grid = (Bp // tb,)

    # Zero-pad operands to the lane-dense / tile-aligned shapes (exact; see header).
    x_pad = jnp.pad(x, ((0, Bp - B), (0, x_p - x_dim)))
    w1_t = jnp.pad(w1.T.astype(dt), ((0, x_p - x_dim), (0, h_p - h_dim)))
    b1_p = jnp.pad(b1.astype(dt), (0, h_p - h_dim)).reshape(1, h_p)
    w2_t = jnp.pad(w2.T.astype(dt), ((0, h_p - h_dim), (0, x_p - x_dim)))
    b2_p = jnp.pad(b2.astype(dt), (0, x_p - x_dim)).reshape(1, x_p)

    itemsize = jnp.dtype(dt).itemsize
    weight_bytes = itemsize * (2 * x_p * h_p + x_p + h_p)
    # Resident weights + double-buffered X/out tiles + f32 hidden + margin.
    est_vmem = (weight_bytes
                + 2 * tb * x_p * itemsize      # X double buffer
                + 2 * tb * x_p * itemsize      # out double buffer
                + tb * h_p * 4                 # f32 hidden intermediate
                + (4 << 20))
    vmem_limit = int(min(max(est_vmem, 16 << 20), 60 << 20))  # v7x-safe cap

    cost = pl.CostEstimate(
        flops=4 * Bp * x_p * h_p,                       # two matmuls, 2*M*N*K each
        transcendentals=Bp * h_p,                       # one exp per hidden unit
        bytes_accessed=itemsize * (2 * Bp * x_p + 2 * x_p * h_p + x_p + h_p),
    )

    # Weights & biases: whole-array VMEM residents, NOT double-buffered.
    # TODO(synk): if x_p*h_p weights ever exceed VMEM, add an h_dim grid axis
    # ('arbitrary') with a pl.when-initialized f32 accumulator instead.
    resident = pl.BlockSpec(memory_space=pltpu.MemorySpace.VMEM)

    out = pl.pallas_call(
        upscale_kernel,
        out_shape=jax.ShapeDtypeStruct((Bp, x_p), dt),
        grid_spec=pltpu.PrefetchScalarGridSpec(
            num_scalar_prefetch=0,
            grid=grid,
            in_specs=[
                pl.BlockSpec((tb, x_p), lambda i: (i, 0)),   # X tile (pipelined)
                resident,                                    # W1^T
                resident,                                    # b1
                resident,                                    # W2^T
                resident,                                    # b2
            ],
            out_specs=pl.BlockSpec((tb, x_p), lambda i: (i, 0)),
        ),
        compiler_params=pltpu.CompilerParams(
            dimension_semantics=("parallel",),
            vmem_limit_bytes=vmem_limit,
        ),
        cost_estimate=cost,
    )(x_pad, w1_t, b1_p, w2_t, b2_p)

    return out[:B, :x_dim]


def upscale_block_ref(x, w1, b1, w2, b2):
    h = x @ w1.T + b1
    h = h * jax.nn.sigmoid(h)
    return h @ w2.T + b2


if __name__ == "__main__":
    # Small shapes consistent with the module: batch=8, x_dim=32, h_dim=64.
    B, x_dim, h_dim = 8, 32, 64
    key = jax.random.PRNGKey(0)
    kx, k1, k2, k3, k4 = jax.random.split(key, 5)

    x = jax.random.normal(kx, (B, x_dim), dtype=jnp.float32)

    # nn.Linear-shaped params: W (out, in), b (out,), PyTorch-style init scale.
    w1 = jax.random.uniform(k1, (h_dim, x_dim), minval=-1.0, maxval=1.0) / jnp.sqrt(x_dim)
    b1 = jax.random.uniform(k2, (h_dim,), minval=-1.0, maxval=1.0) / jnp.sqrt(x_dim)
    w2 = jax.random.uniform(k3, (x_dim, h_dim), minval=-1.0, maxval=1.0) / jnp.sqrt(h_dim)
    b2 = jax.random.uniform(k4, (x_dim,), minval=-1.0, maxval=1.0) / jnp.sqrt(h_dim)

    out = upscale_block(x, w1, b1, w2, b2)
    out = jax.block_until_ready(out)

    ref = upscale_block_ref(x, w1, b1, w2, b2)
    assert out.shape == (B, x_dim)
    assert jnp.allclose(out, ref, atol=1e-5, rtol=1e-5), "mismatch vs reference"

    # Ragged-batch path (pads to a multiple of tb, slices back).
    out5 = jax.block_until_ready(upscale_block(x[:5], w1, b1, w2, b2))
    assert out5.shape == (5, x_dim)
    assert jnp.allclose(out5, ref[:5], atol=1e-5, rtol=1e-5), "ragged mismatch"

    print("KERNEL_OK")
</pallas_src>

<mosaic_0001>
module attributes {stable_mosaic.version = 11 : i64} {
  func.func @upscale_kernel(%arg0: i32, %arg1: memref<8x128xf32, #tpu.memory_space<vmem>>, %arg2: memref<128x128xf32, #tpu.memory_space<vmem>>, %arg3: memref<1x128xf32, #tpu.memory_space<vmem>>, %arg4: memref<128x128xf32, #tpu.memory_space<vmem>>, %arg5: memref<1x128xf32, #tpu.memory_space<vmem>>, %arg6: memref<8x128xf32, #tpu.memory_space<vmem>>) attributes {dimension_semantics = [#tpu.dimension_semantics<parallel>], iteration_bounds = array<i64: 1>, scalar_prefetch = 0 : i64, scratch_operands = 0 : i64, tpu.core_type = #tpu.core_type<tc>, window_params = [{transform_indices = @transform_0, window_bounds = array<i64: 8, 128>}, {pipeline_mode = #tpu.pipeline_mode<synchronous>, transform_indices = @transform_1, window_bounds = array<i64: 128, 128>}, {pipeline_mode = #tpu.pipeline_mode<synchronous>, transform_indices = @transform_2, window_bounds = array<i64: 1, 128>}, {pipeline_mode = #tpu.pipeline_mode<synchronous>, transform_indices = @transform_3, window_bounds = array<i64: 128, 128>}, {pipeline_mode = #tpu.pipeline_mode<synchronous>, transform_indices = @transform_4, window_bounds = array<i64: 1, 128>}, {transform_indices = @transform_5, window_bounds = array<i64: 8, 128>}]} {
    %c0 = arith.constant 0 : index
    %c0_0 = arith.constant 0 : index
    %0 = vector.load %arg1[%c0, %c0_0] : memref<8x128xf32, #tpu.memory_space<vmem>>, vector<8x128xf32>
    %c0_1 = arith.constant 0 : index
    %c0_2 = arith.constant 0 : index
    %1 = vector.load %arg2[%c0_1, %c0_2] : memref<128x128xf32, #tpu.memory_space<vmem>>, vector<128x128xf32>
    %cst = arith.constant dense<0.000000e+00> : vector<8x128xf32>
    %2 = tpu.matmul %0, %1, %cst {dimension_numbers = #tpu.dot_dimension_numbers<[1], [0], [0], [1], [0, 0, 1, 1], [], []>} : vector<8x128xf32>, vector<128x128xf32>, vector<8x128xf32> -> vector<8x128xf32>
    %c0_3 = arith.constant 0 : index
    %c0_4 = arith.constant 0 : index
    %3 = vector.load %arg3[%c0_3, %c0_4] : memref<1x128xf32, #tpu.memory_space<vmem>>, vector<1x128xf32>
    %4 = vector.broadcast %3 : vector<1x128xf32> to vector<8x128xf32>
    %5 = arith.addf %2, %4 : vector<8x128xf32>
    %6 = arith.negf %5 : vector<8x128xf32>
    %7 = math.exp %6 : vector<8x128xf32>
    %cst_5 = arith.constant 1.000000e+00 : f32
    %8 = vector.broadcast %cst_5 : f32 to vector<8x128xf32>
    %9 = arith.addf %8, %7 : vector<8x128xf32>
    %10 = arith.divf %8, %9 : vector<8x128xf32>
    %11 = arith.mulf %5, %10 : vector<8x128xf32>
    %c0_6 = arith.constant 0 : index
    %c0_7 = arith.constant 0 : index
    %12 = vector.load %arg4[%c0_6, %c0_7] : memref<128x128xf32, #tpu.memory_space<vmem>>, vector<128x128xf32>
    %cst_8 = arith.constant dense<0.000000e+00> : vector<8x128xf32>
    %13 = tpu.matmul %11, %12, %cst_8 {dimension_numbers = #tpu.dot_dimension_numbers<[1], [0], [0], [1], [0, 0, 1, 1], [], []>} : vector<8x128xf32>, vector<128x128xf32>, vector<8x128xf32> -> vector<8x128xf32>
    %c0_9 = arith.constant 0 : index
    %c0_10 = arith.constant 0 : index
    %14 = vector.load %arg5[%c0_9, %c0_10] : memref<1x128xf32, #tpu.memory_space<vmem>>, vector<1x128xf32>
    %15 = vector.broadcast %14 : vector<1x128xf32> to vector<8x128xf32>
    %16 = arith.addf %13, %15 : vector<8x128xf32>
    %c0_11 = arith.constant 0 : index
    %c0_12 = arith.constant 0 : index
    %17 = vector.load %arg6[%c0_11, %c0_12] : memref<8x128xf32, #tpu.memory_space<vmem>>, vector<8x128xf32>
    tpu.vector_store %arg6[%c0_11, %c0_12], %16 {strides = array<i32>} : memref<8x128xf32, #tpu.memory_space<vmem>>, vector<8x128xf32>,
    return
  }
  func.func @transform_0(%arg0: i32) -> (i32, i32) {
    %c0_i32 = arith.constant 0 : i32
    %c0_i32_0 = arith.constant 0 : i32
    return %arg0, %c0_i32 : i32, i32
  }
  func.func @transform_1(%arg0: i32) -> (i32, i32) {
    %c0_i32 = arith.constant 0 : i32
    %c0_i32_0 = arith.constant 0 : i32
    %c0_i32_1 = arith.constant 0 : i32
    return %c0_i32, %c0_i32_0 : i32, i32
  }
  func.func @transform_2(%arg0: i32) -> (i32, i32) {
    %c0_i32 = arith.constant 0 : i32
    %c0_i32_0 = arith.constant 0 : i32
    %c0_i32_1 = arith.constant 0 : i32
    return %c0_i32, %c0_i32_0 : i32, i32
  }
  func.func @transform_3(%arg0: i32) -> (i32, i32) {
    %c0_i32 = arith.constant 0 : i32
    %c0_i32_0 = arith.constant 0 : i32
    %c0_i32_1 = arith.constant 0 : i32
    return %c0_i32, %c0_i32_0 : i32, i32
  }
  func.func @transform_4(%arg0: i32) -> (i32, i32) {
    %c0_i32 = arith.constant 0 : i32
    %c0_i32_0 = arith.constant 0 : i32
    %c0_i32_1 = arith.constant 0 : i32
    return %c0_i32, %c0_i32_0 : i32, i32
  }
  func.func @transform_5(%arg0: i32) -> (i32, i32) {
    %c0_i32 = arith.constant 0 : i32
    %c0_i32_0 = arith.constant 0 : i32
    return %arg0, %c0_i32 : i32, i32
  }
}

</mosaic_0001>

<llo_original>
// kernel: tpu_custom_call.1
$region0: #{tpu_custom_call.1}
  #allocation0 [shape = 'u32[]', space=smem, size = 0x4, offset = 0x4, fixed_abs, tag = 'smem constant byte address 0x4 - core index']
  #allocation1 [shape = 'u32[144,128]{1,0:T(1,128)}', space=vmem, size = 0x12000, scoped, tag = 'internal scratch']
  %s0 = inlined_call_operand.hbm [shape: f32[8,128], index: 0, kind: input, shape index: {}]
  %s1 = inlined_call_operand.hbm [shape: f32[128,128], index: 1, kind: input, shape index: {}]
  %s2 = inlined_call_operand.vmem [shape: f32[1,128], index: 2, kind: input, shape index: {}]
  %s3 = inlined_call_operand.hbm [shape: f32[128,128], index: 3, kind: input, shape index: {}]
  %s4 = inlined_call_operand.vmem [shape: f32[1,128], index: 4, kind: input, shape index: {}]
  %s5 = inlined_call_operand.hbm [shape: f32[8,128], index: 5, kind: output, shape index: {}]
  %s6 = sld [smem:[#allocation0]]
  $region42: #{tpu_custom_call.1} parent=0
    _
  %s8 = ssub.s32 1, %s6
  %s9 = scalar_select 0, %s8, %s6
  $region1: #{tpu_custom_call.1} parent=0
    #allocation2 [shape = 'u8[4096]{0}', space=vmem, size = 0x1000, scoped, tag = 'input window, operand 0, single buffered']
    #allocation3 [shape = 's32[1]{0}', space=sflag, size = 0x4, scoped, tag = 'scoped memory for tpu_custom_call.1']
    #allocation4 [shape = 's32[1]{0}', space=sflag, size = 0x4, scoped, tag = 'scoped memory for tpu_custom_call.1']
    #allocation5 [shape = 'u8[65536]{0}', space=vmem, size = 0x10000, scoped, tag = 'input window, operand 1, single buffered']
    #allocation6 [shape = 's32[1]{0}', space=sflag, size = 0x4, scoped, tag = 'scoped memory for tpu_custom_call.1']
    #allocation7 [shape = 'u8[65536]{0}', space=vmem, size = 0x10000, scoped, tag = 'input window, operand 3, single buffered']
    #allocation8 [shape = 'u8[4096]{0}', space=vmem, size = 0x1000, scoped, tag = 'output window, operand 0, single buffered']
    %10 = vsyncpa [#allocation3], 0
    %11 = vsyncpa [#allocation6], 0
    %12 = vsyncpa [#allocation4], 0
    // Predicated region
    $region2: #{tpu_custom_call.1} parent=1 // pred_check
      _
    $region3: #{tpu_custom_call.1} parent=1 // pred_check_branch
      %14 = sbr.rel (0) target = $region5
    $region4: #{tpu_custom_call.1} parent=1 // pred_region
      %s16 = ssub.s32 128, 128
      %17 = vsyncadd [#allocation3], %s16
      %s19 = sshll.u32 [#allocation2], 4
      %s20 = int_to_ptr.vmem [resolvable:$true] %s19
      %22 = dma.hbm_to_vmem [thread:$0]  %s0, 128, %s20, [#allocation3]
    $region5: #{tpu_custom_call.1} parent=1 // pred_fallthru
      _
    // Predicated region
    $region6: #{tpu_custom_call.1} parent=1 // pred_check
      _
    $region7: #{tpu_custom_call.1} parent=1 // pred_check_branch
      %24 = sbr.rel (0) target = $region9
    $region8: #{tpu_custom_call.1} parent=1 // pred_region
      %s26 = ssub.s32 2048, 2048
      %27 = vsyncadd [#allocation6], %s26
      %s28 = sshll.u32 [#allocation5], 4
      %s29 = int_to_ptr.vmem [resolvable:$true] %s28
      %34 = dma.hbm_to_vmem [thread:$0]  %s1, 2048, %s29, [#allocation6], 128, 128, 8
    $region9: #{tpu_custom_call.1} parent=1 // pred_fallthru
      _
    // Predicated region
    $region10: #{tpu_custom_call.1} parent=1 // pred_check
      _
    $region11: #{tpu_custom_call.1} parent=1 // pred_check_branch
      %36 = sbr.rel (0) target = $region13
    $region12: #{tpu_custom_call.1} parent=1 // pred_region
      _
    $region13: #{tpu_custom_call.1} parent=1 // pred_fallthru
      _
    // Predicated region
    $region14: #{tpu_custom_call.1} parent=1 // pred_check
      _
    $region15: #{tpu_custom_call.1} parent=1 // pred_check_branch
      %38 = sbr.rel (0) target = $region17
    $region16: #{tpu_custom_call.1} parent=1 // pred_region
      %s40 = ssub.s32 2048, 2048
      %41 = vsyncadd [#allocation6], %s40
      %s42 = sshll.u32 [#allocation7], 4
      %s43 = int_to_ptr.vmem [resolvable:$true] %s42
      %48 = dma.hbm_to_vmem [thread:$0]  %s3, 2048, %s43, [#allocation6], 128, 128, 8
    $region17: #{tpu_custom_call.1} parent=1 // pred_fallthru
      _
    // Predicated region
    $region18: #{tpu_custom_call.1} parent=1 // pred_check
      _
    $region19: #{tpu_custom_call.1} parent=1 // pred_check_branch
      %50 = sbr.rel (0) target = $region21
    $region20: #{tpu_custom_call.1} parent=1 // pred_region
      _
    $region21: #{tpu_custom_call.1} parent=1 // pred_fallthru
      _
    // Predicated region
    $region22: #{tpu_custom_call.1} parent=1 // pred_check
      _
    $region23: #{tpu_custom_call.1} parent=1 // pred_check_branch
      %52 = sbr.rel (0) target = $region25
    $region24: #{tpu_custom_call.1} parent=1 // pred_region
      %53 = dma.done [#allocation3], 128
    $region25: #{tpu_custom_call.1} parent=1 // pred_fallthru
      _
    // Predicated region
    $region26: #{tpu_custom_call.1} parent=1 // pred_check
      _
    $region27: #{tpu_custom_call.1} parent=1 // pred_check_branch
      %55 = sbr.rel (0) target = $region29
    $region28: #{tpu_custom_call.1} parent=1 // pred_region
      %56 = dma.done [#allocation6], 2048
    $region29: #{tpu_custom_call.1} parent=1 // pred_fallthru
      _
    // Predicated region
    $region30: #{tpu_custom_call.1} parent=1 // pred_check
      _
    $region31: #{tpu_custom_call.1} parent=1 // pred_check_branch
      %58 = sbr.rel (0) target = $region33
    $region32: #{tpu_custom_call.1} parent=1 // pred_region
      %59 = dma.done [#allocation6], 2048
    $region33: #{tpu_custom_call.1} parent=1 // pred_fallthru
      _
    %v60 = vld [vmem:[#allocation2] sm:$0xff]
    %v61 = vld [vmem:[#allocation5] sm:$0xff]
    %v62 = vld [vmem:[#allocation5 + $0x8] sm:$0xff]
    %v63 = vld [vmem:[#allocation5 + $0x10] sm:$0xff]
    %v64 = vld [vmem:[#allocation5 + $0x18] sm:$0xff]
    %v65 = vld [vmem:[#allocation5 + $0x20] sm:$0xff]
    %v66 = vld [vmem:[#allocation5 + $0x28] sm:$0xff]
    %v67 = vld [vmem:[#allocation5 + $0x30] sm:$0xff]
    %v68 = vld [vmem:[#allocation5 + $0x38] sm:$0xff]
    %v69 = vld [vmem:[#allocation5 + $0x40] sm:$0xff]
    %v70 = vld [vmem:[#allocation5 + $0x48] sm:$0xff]
    %v71 = vld [vmem:[#allocation5 + $0x50] sm:$0xff]
    %v72 = vld [vmem:[#allocation5 + $0x58] sm:$0xff]
    %v73 = vld [vmem:[#allocation5 + $0x60] sm:$0xff]
    %v74 = vld [vmem:[#allocation5 + $0x68] sm:$0xff]
    %v75 = vld [vmem:[#allocation5 + $0x70] sm:$0xff]
    %v76 = vld [vmem:[#allocation5 + $0x78] sm:$0xff]
    %v77 = vld [vmem:[%s2] sm:$0x1]
    %v79 = vlaneseq
    %v80 = vshrl.u32 %v79, 7
    %v81 = vsub.s32 0, %v80
    %v82 = vrot.slane %v77, %v81
    %84 = vmatprep.subr.mxu0 0.0
    %85 = vmatpush1.msra.mxu0 %v76
    %86 = vmatprep.subr.mxu0 0.0
    %87 = vmatpush1.msra.mxu0 %v75
    %88 = vmatprep.subr.mxu0 0.0
    %89 = vmatpush1.msra.mxu0 %v74
    %90 = vmatprep.subr.mxu0 0.0
    %91 = vmatpush1.msra.mxu0 %v73
    %92 = vmatprep.subr.mxu0 0.0
    %93 = vmatpush1.msra.mxu0 %v72
    %94 = vmatprep.subr.mxu0 0.0
    %95 = vmatpush1.msra.mxu0 %v71
    %96 = vmatprep.subr.mxu0 0.0
    %97 = vmatpush1.msra.mxu0 %v70
    %98 = vmatprep.subr.mxu0 0.0
    %99 = vmatpush1.msra.mxu0 %v69
    %100 = vmatprep.subr.mxu0 0.0
    %101 = vmatpush1.msra.mxu0 %v68
    %102 = vmatprep.subr.mxu0 0.0
    %103 = vmatpush1.msra.mxu0 %v67
    %104 = vmatprep.subr.mxu0 0.0
    %105 = vmatpush1.msra.mxu0 %v66
    %106 = vmatprep.subr.mxu0 0.0
    %107 = vmatpush1.msra.mxu0 %v65
    %108 = vmatprep.subr.mxu0 0.0
    %109 = vmatpush1.msra.mxu0 %v64
    %110 = vmatprep.subr.mxu0 0.0
    %111 = vmatpush1.msra.mxu0 %v63
    %112 = vmatprep.subr.mxu0 0.0
    %113 = vmatpush1.msra.mxu0 %v62
    %114 = vmatprep.subr.mxu0 0.0
    %115 = vmatpush1.msra.mxu0 %v61
    %116 = vmatprep.subr.mxu0 0.0
    %117 = vmatpush2.msra.mxu0 0.0
    %118 = vmatprep.subr.mxu0 0.0
    %119 = vmatpush2.msra.mxu0 0.0
    %120 = vmatprep.subr.mxu0 0.0
    %121 = vmatpush2.msra.mxu0 0.0
    %122 = vmatprep.subr.mxu0 0.0
    %123 = vmatpush2.msra.mxu0 0.0
    %124 = vmatprep.subr.mxu0 0.0
    %125 = vmatpush2.msra.mxu0 0.0
    %126 = vmatprep.subr.mxu0 0.0
    %127 = vmatpush2.msra.mxu0 0.0
    %128 = vmatprep.subr.mxu0 0.0
    %129 = vmatpush2.msra.mxu0 0.0
    %130 = vmatprep.subr.mxu0 0.0
    %131 = vmatpush2.msra.mxu0 0.0
    %132 = vmatprep.subr.mxu0 0.0
    %133 = vmatpush2.msra.mxu0 0.0
    %134 = vmatprep.subr.mxu0 0.0
    %135 = vmatpush2.msra.mxu0 0.0
    %136 = vmatprep.subr.mxu0 0.0
    %137 = vmatpush2.msra.mxu0 0.0
    %138 = vmatprep.subr.mxu0 0.0
    %139 = vmatpush2.msra.mxu0 0.0
    %140 = vmatprep.subr.mxu0 0.0
    %141 = vmatpush2.msra.mxu0 0.0
    %142 = vmatprep.subr.mxu0 0.0
    %143 = vmatpush2.msra.mxu0 0.0
    %144 = vmatprep.subr.mxu0 0.0
    %145 = vmatpush2.msra.mxu0 0.0
    %146 = vmatprep.subr.mxu0 0.0
    %147 = vmatpush2.msra.mxu0 0.0
    %148 = vmatprep.mubr.f32.mxu0 0.0
    %149 = vmatmul.mubr.f32.gmra.mxu0 %v60
    %v150 = vpop.f32.mrf.mxu0
    %v151 = vadd.f32 %v82, %v150
    %v152 = vpop.f32.mrf.mxu0
    %153 = vdwg.mxu0
    %v154 = vxor.u32 %v151, 2147483648
    %v155 = vmul.f32 %v154, 1.442695
    %v156 = vpow.pop %v155
    %v157 = vadd.f32 %v156, 1.0
    %v158 = vrcp.pop %v157
    %v159 = vmul.f32 1.0, %v158
    %v160 = vmul.f32 %v151, %v159
    %v161 = vld [vmem:[#allocation7] sm:$0xff]
    %v162 = vld [vmem:[#allocation7 + $0x8] sm:$0xff]
    %v163 = vld [vmem:[#allocation7 + $0x10] sm:$0xff]
    %v164 = vld [vmem:[#allocation7 + $0x18] sm:$0xff]
    %v165 = vld [vmem:[#allocation7 + $0x20] sm:$0xff]
    %v166 = vld [vmem:[#allocation7 + $0x28] sm:$0xff]
    %v167 = vld [vmem:[#allocation7 + $0x30] sm:$0xff]
    %v168 = vld [vmem:[#allocation7 + $0x38] sm:$0xff]
    %v169 = vld [vmem:[#allocation7 + $0x40] sm:$0xff]
    %v170 = vld [vmem:[#allocation7 + $0x48] sm:$0xff]
    %v171 = vld [vmem:[#allocation7 + $0x50] sm:$0xff]
    %v172 = vld [vmem:[#allocation7 + $0x58] sm:$0xff]
    %v173 = vld [vmem:[#allocation7 + $0x60] sm:$0xff]
    %v174 = vld [vmem:[#allocation7 + $0x68] sm:$0xff]
    %v175 = vld [vmem:[#allocation7 + $0x70] sm:$0xff]
    %v176 = vld [vmem:[#allocation7 + $0x78] sm:$0xff]
    %v177 = vld [vmem:[%s4] sm:$0x1]
    %v179 = vlaneseq
    %v180 = vshrl.u32 %v179, 7
    %v181 = vsub.s32 0, %v180
    %v182 = vrot.slane %v177, %v181
    %184 = vmatprep.subr.mxu0 0.0
    %185 = vmatpush1.msra.mxu0 %v176
    %186 = vmatprep.subr.mxu0 0.0
    %187 = vmatpush1.msra.mxu0 %v175
    %188 = vmatprep.subr.mxu0 0.0
    %189 = vmatpush1.msra.mxu0 %v174
    %190 = vmatprep.subr.mxu0 0.0
    %191 = vmatpush1.msra.mxu0 %v173
    %192 = vmatprep.subr.mxu0 0.0
    %193 = vmatpush1.msra.mxu0 %v172
    %194 = vmatprep.subr.mxu0 0.0
    %195 = vmatpush1.msra.mxu0 %v171
    %196 = vmatprep.subr.mxu0 0.0
    %197 = vmatpush1.msra.mxu0 %v170
    %198 = vmatprep.subr.mxu0 0.0
    %199 = vmatpush1.msra.mxu0 %v169
    %200 = vmatprep.subr.mxu0 0.0
    %201 = vmatpush1.msra.mxu0 %v168
    %202 = vmatprep.subr.mxu0 0.0
    %203 = vmatpush1.msra.mxu0 %v167
    %204 = vmatprep.subr.mxu0 0.0
    %205 = vmatpush1.msra.mxu0 %v166
    %206 = vmatprep.subr.mxu0 0.0
    %207 = vmatpush1.msra.mxu0 %v165
    %208 = vmatprep.subr.mxu0 0.0
    %209 = vmatpush1.msra.mxu0 %v164
    %210 = vmatprep.subr.mxu0 0.0
    %211 = vmatpush1.msra.mxu0 %v163
    %212 = vmatprep.subr.mxu0 0.0
    %213 = vmatpush1.msra.mxu0 %v162
    %214 = vmatprep.subr.mxu0 0.0
    %215 = vmatpush1.msra.mxu0 %v161
    %216 = vmatprep.subr.mxu0 0.0
    %217 = vmatpush2.msra.mxu0 0.0
    %218 = vmatprep.subr.mxu0 0.0
    %219 = vmatpush2.msra.mxu0 0.0
    %220 = vmatprep.subr.mxu0 0.0
    %221 = vmatpush2.msra.mxu0 0.0
    %222 = vmatprep.subr.mxu0 0.0
    %223 = vmatpush2.msra.mxu0 0.0
    %224 = vmatprep.subr.mxu0 0.0
    %225 = vmatpush2.msra.mxu0 0.0
    %226 = vmatprep.subr.mxu0 0.0
    %227 = vmatpush2.msra.mxu0 0.0
    %228 = vmatprep.subr.mxu0 0.0
    %229 = vmatpush2.msra.mxu0 0.0
    %230 = vmatprep.subr.mxu0 0.0
    %231 = vmatpush2.msra.mxu0 0.0
    %232 = vmatprep.subr.mxu0 0.0
    %233 = vmatpush2.msra.mxu0 0.0
    %234 = vmatprep.subr.mxu0 0.0
    %235 = vmatpush2.msra.mxu0 0.0
    %236 = vmatprep.subr.mxu0 0.0
    %237 = vmatpush2.msra.mxu0 0.0
    %238 = vmatprep.subr.mxu0 0.0
    %239 = vmatpush2.msra.mxu0 0.0
    %240 = vmatprep.subr.mxu0 0.0
    %241 = vmatpush2.msra.mxu0 0.0
    %242 = vmatprep.subr.mxu0 0.0
    %243 = vmatpush2.msra.mxu0 0.0
    %244 = vmatprep.subr.mxu0 0.0
    %245 = vmatpush2.msra.mxu0 0.0
    %246 = vmatprep.subr.mxu0 0.0
    %247 = vmatpush2.msra.mxu0 0.0
    %248 = vmatprep.mubr.f32.mxu0 0.0
    %249 = vmatmul.mubr.f32.gmra.mxu0 %v160
    %v250 = vpop.f32.mrf.mxu0
    %v251 = vadd.f32 %v182, %v250
    %v252 = vpop.f32.mrf.mxu0
    %253 = vdwg.mxu0
    %254 = vst [vmem:[#allocation8] sm:$0xff] %v251
    // Predicated region
    $region34: #{tpu_custom_call.1} parent=1 // pred_check
      _
    $region35: #{tpu_custom_call.1} parent=1 // pred_check_branch
      %256 = sbr.rel (0) target = $region37
    $region36: #{tpu_custom_call.1} parent=1 // pred_region
      %s258 = ssub.s32 128, 128
      %259 = vsyncadd [#allocation4], %s258
      %s261 = sshll.u32 [#allocation8], 4
      %s262 = int_to_ptr.vmem [resolvable:$true] %s261
      %264 = dma.vmem_to_hbm [thread:$0]  %s262, 128, %s5, [#allocation4]
    $region37: #{tpu_custom_call.1} parent=1 // pred_fallthru
      _
    // Predicated region
    $region38: #{tpu_custom_call.1} parent=1 // pred_check
      _
    $region39: #{tpu_custom_call.1} parent=1 // pred_check_branch
      %266 = sbr.rel (0) target = $region41
    $region40: #{tpu_custom_call.1} parent=1 // pred_region
      %267 = dma.done [#allocation4], 128
    $region41: #{tpu_custom_call.1} parent=1 // pred_fallthru
      _
    %268 = vsyncpa [#allocation3], 1
    %269 = vsyncpa [#allocation6], 1
    %270 = vsyncpa [#allocation4], 1

</llo_original>
